<compile_context>
chip_gen: v5e
topology: v5e:2x2
jax: 0.10.0
libtpu: 0.0.40
codegen_flags: <defaults>
</compile_context>

<pallas_src>
import functools

import jax
import jax.numpy as jnp
from jax.experimental import pallas as pl
from jax.experimental.pallas import tpu as pltpu


_BN_EPS = 1e-5


def _round_up(x, m):
    return ((x + m - 1) // m) * m


def _pad_rows(a, m=8):
    r = a.shape[0]
    rp = _round_up(r, m)
    if rp == r:
        return a
    return jnp.concatenate([a, jnp.zeros((rp - r, a.shape[1]), a.dtype)], axis=0)


def _pad_cols(a, m=8):
    c = a.shape[-1]
    cp = _round_up(c, m)
    if cp == c:
        return a
    pad = jnp.zeros(a.shape[:-1] + (cp - c,), a.dtype)
    return jnp.concatenate([a, pad], axis=-1)


# ---------------------------------------------------------------------------
# Fused kernel: one-hot-embedding matmuls + cont features -> hidden MLP -> out
# ---------------------------------------------------------------------------
def _fused_kernel(x_cat_ref, x_cont_ref, *refs, n_embed_tables, n_cont):
    o_ref = refs[-1]
    wrefs = refs[:-1]
    t_refs = wrefs[:n_embed_tables]                 # per-embedding (ni_pad, H0p)
    w0c_ref = wrefs[n_embed_tables]                 # (n_cont_pad, H0p)
    b0_ref = wrefs[n_embed_tables + 1]              # (1, H0p)
    rest = wrefs[n_embed_tables + 2:]               # (w1, b1, ..., w_out, b_out)

    tb = x_cont_ref.shape[0]

    # --- Layer 0: continuous features (bn_cont folded into w0c / b0) --------
    xc = x_cont_ref[...]                            # (TB, n_cont) f32
    kcp = w0c_ref.shape[0]
    if kcp > n_cont:                                # lane-pad in VMEM only (cheap)
        xc = jnp.concatenate(
            [xc, jnp.zeros((tb, kcp - n_cont), jnp.float32)], axis=1)
    h = jnp.dot(xc, w0c_ref[...], preferred_element_type=jnp.float32) + b0_ref[...]

    # --- Layer 0: embeddings as one-hot matmuls against E_i @ W0_rows_i -----
    for i in range(n_embed_tables):
        tbl = t_refs[i][...]                        # (ni_pad, H0p)
        ids = x_cat_ref[:, i:i + 1]                 # (TB, 1) int32
        oh = (ids == jax.lax.broadcasted_iota(
            jnp.int32, (tb, tbl.shape[0]), 1)).astype(jnp.float32)
        h = h + jnp.dot(oh, tbl, preferred_element_type=jnp.float32)
    h = jnp.maximum(h, 0.0)                         # ReLU of hidden layer 0

    # --- Remaining hidden layers (BN folded) and the output Linear ----------
    n_rest = len(rest) // 2
    for l in range(n_rest):
        w = rest[2 * l][...]
        b = rest[2 * l + 1][...]
        h = jnp.dot(h, w, preferred_element_type=jnp.float32) + b
        if l < n_rest - 1:                          # no ReLU on the output Linear
            h = jnp.maximum(h, 0.0)
    o_ref[...] = h                                  # (TB, n_out), masked narrow store


def _choose_tb(batch, batch_tile):
    # At least ~2 grid steps when the batch allows it, so ("parallel",) can
    # shard batch tiles across both v7x TensorCores; multiple of 8 sublanes.
    half = _round_up(max(1, -(-batch // 2)), 8)
    tb = max(8, min(batch_tile, half))
    return min(tb, _round_up(batch, 8))


def fused_tabular_pallas(prep, x_cat, x_cont, *, batch_tile=1024):
    """prep: output of prepare_params().  x_cat (B, n_cat) int, x_cont (B, n_cont)."""
    B, n_cat = x_cat.shape
    n_cont = x_cont.shape[1]

    tables = prep["tables"]
    w0c, b0 = prep["w0c"], prep["b0"]
    rest = prep["rest"]
    n_out = rest[-1][0].shape[1]                    # output Linear is never col-padded

    TB = _choose_tb(B, batch_tile)
    grid = (pl.cdiv(B, TB),)

    flat_wb = list(tables) + [w0c, b0]
    for (w, b) in rest:
        flat_wb += [w, b]

    kernel = functools.partial(
        _fused_kernel, n_embed_tables=len(tables), n_cont=n_cont)

    def _pinned(a):
        # whole-array block, constant index -> stays resident in VMEM
        return pl.BlockSpec(a.shape, lambda i: (0, 0))

    in_specs = [
        pl.BlockSpec((TB, n_cat), lambda i: (i, 0)),    # x_cat, true width
        pl.BlockSpec((TB, n_cont), lambda i: (i, 0)),   # x_cont, true width
    ] + [_pinned(a) for a in flat_wb]

    return pl.pallas_call(
        kernel,
        out_shape=jax.ShapeDtypeStruct((B, n_out), jnp.float32),
        grid=grid,
        in_specs=in_specs,
        out_specs=pl.BlockSpec((TB, n_out), lambda i: (i, 0)),   # true width output
        compiler_params=pltpu.CompilerParams(dimension_semantics=("parallel",)),
    )(x_cat.astype(jnp.int32), x_cont.astype(jnp.float32), *flat_wb)


# ---------------------------------------------------------------------------
# Host-side folding (eval-mode BN, exact) + kernel-ready padding.  Call ONCE.
# ---------------------------------------------------------------------------
def _fold_params(params):
    """Fold all eval-mode BN affines into adjacent Linear weights/biases."""
    num_embed = sum(int(t.shape[1]) for t in params["embed"])
    hidden = params["hidden"]

    gamma_c, beta_c, rm_c, rv_c = params["bn_cont"]
    scale_c = gamma_c / jnp.sqrt(rv_c + _BN_EPS)
    shift_c = beta_c - rm_c * scale_c

    folded = []

    # First hidden layer: fold bn_cont into the continuous-feature rows.
    w0, b0, g0, be0, rm0, rv0 = hidden[0]
    w0f = w0.at[num_embed:, :].multiply(scale_c[:, None])
    b0f = b0 + shift_c @ w0[num_embed:, :]
    folded.append((w0f, b0f))
    prev_scale = g0 / jnp.sqrt(rv0 + _BN_EPS)
    prev_shift = be0 - rm0 * prev_scale

    # Remaining hidden layers: fold previous layer's BN into this Linear.
    for (w, b, g, be, rm, rv) in hidden[1:]:
        folded.append((prev_scale[:, None] * w, b + prev_shift @ w))
        prev_scale = g / jnp.sqrt(rv + _BN_EPS)
        prev_shift = be - rm * prev_scale

    # Output Linear: fold last hidden BN.
    w_out, b_out = params["out"]
    folded.append((prev_scale[:, None] * w_out, b_out + prev_shift @ w_out))
    return folded


def prepare_params(params):
    """Fold BN, fold embedding tables into layer 0, and 8-align VMEM tiles.

    Hoisted out of the per-call path (do this once per parameter set and
    re-run it if the parameters change).
    """
    folded = _fold_params(params)
    n_layers = len(folded)

    mats = []
    for l, (w, b) in enumerate(folded):
        w = jnp.asarray(w, jnp.float32)
        b = jnp.asarray(b, jnp.float32).reshape(1, -1)
        if l < n_layers - 1:                 # hidden widths -> multiples of 8
            w = _pad_cols(w)
            b = _pad_cols(b)
        mats.append((w, b))

    # Layer 0: split rows into per-embedding blocks (pre-multiplied by the
    # embedding tables) and the continuous-feature block.
    w0, b0 = mats[0]
    nfs = [int(t.shape[1]) for t in params["embed"]]
    num_embed = sum(nfs)
    tables, off = [], 0
    for tbl, nf in zip(params["embed"], nfs):
        t = jnp.asarray(tbl, jnp.float32) @ w0[off:off + nf, :]   # (ni, H0p)
        tables.append(_pad_rows(t))
        off += nf
    w0c = _pad_rows(w0[num_embed:, :])

    rest = [(_pad_rows(w), b) for (w, b) in mats[1:]]
    return {"tables": tables, "w0c": w0c, "b0": b0, "rest": rest}


# ---------------------------------------------------------------------------
# Parameter construction (deterministic, synthetic)
# ---------------------------------------------------------------------------
def init_params(key, embed_size, n_cont, n_out, neuron_layer):
    params = {}
    # Exact key budget: E (embeddings) + 4 (bn_cont) + 4*L (hidden) + 2 (out).
    n_keys = len(embed_size) + 4 + 4 * len(neuron_layer) + 2
    k_iter = iter(jax.random.split(key, n_keys))

    # Embedding tables
    params["embed"] = [
        0.1 * jax.random.normal(next(k_iter), (ni, nf), dtype=jnp.float32)
        for (ni, nf) in embed_size
    ]

    # BatchNorm1d on continuous features (gamma, beta, running_mean, running_var)
    params["bn_cont"] = (
        1.0 + 0.1 * jax.random.normal(next(k_iter), (n_cont,), dtype=jnp.float32),
        0.1 * jax.random.normal(next(k_iter), (n_cont,), dtype=jnp.float32),
        0.05 * jax.random.normal(next(k_iter), (n_cont,), dtype=jnp.float32),
        jnp.abs(1.0 + 0.1 * jax.random.normal(next(k_iter), (n_cont,), dtype=jnp.float32)),
    )

    num_embed = sum(nf for _, nf in embed_size)
    n_in = num_embed + n_cont

    # Hidden layers: Linear -> ReLU -> BatchNorm1d -> Dropout
    hidden = []
    for width in neuron_layer:
        w = 0.1 * jax.random.normal(next(k_iter), (n_in, width), dtype=jnp.float32)
        b = 0.01 * jax.random.normal(next(k_iter), (width,), dtype=jnp.float32)
        gamma = 1.0 + 0.05 * jax.random.normal(next(k_iter), (width,), dtype=jnp.float32)
        beta = 0.05 * jax.random.normal(next(k_iter), (width,), dtype=jnp.float32)
        rmean = 0.02 * jnp.ones((width,), jnp.float32)
        rvar = jnp.ones((width,), jnp.float32)
        hidden.append((w, b, gamma, beta, rmean, rvar))
        n_in = width
    params["hidden"] = hidden

    # Output Linear
    params["out"] = (
        0.1 * jax.random.normal(next(k_iter), (neuron_layer[-1], n_out), dtype=jnp.float32),
        0.01 * jax.random.normal(next(k_iter), (n_out,), dtype=jnp.float32),
    )
    return params


# ---------------------------------------------------------------------------
# Pure-JAX reference (eval-mode PyTorch semantics) for validation.
# ---------------------------------------------------------------------------
def reference_forward(params, x_cat, x_cont):
    embs = [jnp.take(tbl, x_cat[:, i], axis=0) for i, tbl in enumerate(params["embed"])]
    x = jnp.concatenate(embs, axis=1)
    g, b_, rm, rv = params["bn_cont"]
    xc = (x_cont - rm) / jnp.sqrt(rv + _BN_EPS) * g + b_
    x = jnp.concatenate([x, xc], axis=1)
    for (w, b, gamma, beta, rmean, rvar) in params["hidden"]:
        x = jnp.maximum(x @ w + b, 0.0)
        x = (x - rmean) / jnp.sqrt(rvar + _BN_EPS) * gamma + beta
    w_out, b_out = params["out"]
    return x @ w_out + b_out


# ---------------------------------------------------------------------------
if __name__ == "__main__":
    # Small, forward-consistent shapes.
    embed_size = [(10, 4), (7, 3), (5, 2)]   # -> num_embed = 9
    n_cont = 5
    n_out = 2
    neuron_layer = [32, 16]
    batch = 8

    key = jax.random.PRNGKey(0)
    k_params, k_cat, k_cont = jax.random.split(key, 3)

    params = init_params(k_params, embed_size, n_cont, n_out, neuron_layer)

    # Categorical inputs: one column per embedding table, values within range.
    cat_cols = []
    for (ni, _), kk in zip(embed_size, jax.random.split(k_cat, len(embed_size))):
        cat_cols.append(jax.random.randint(kk, (batch, 1), 0, ni, dtype=jnp.int32))
    x_cat = jnp.concatenate(cat_cols, axis=1)            # (batch, n_categorical)

    x_cont = jax.random.normal(k_cont, (batch, n_cont), dtype=jnp.float32)

    # Fold / pad ONCE (hoisted out of the per-call path), jit the fused forward.
    prep = prepare_params(params)
    fwd = jax.jit(functools.partial(fused_tabular_pallas, batch_tile=1024))

    out = fwd(prep, x_cat, x_cont)
    out = jax.block_until_ready(out)

    assert out.shape == (batch, n_out), out.shape
    assert bool(jnp.all(jnp.isfinite(out)))

    ref = reference_forward(params, x_cat, x_cont)
    assert bool(jnp.allclose(out, ref, rtol=2e-2, atol=2e-2)), (
        float(jnp.max(jnp.abs(out - ref))))

    print("KERNEL_OK")
</pallas_src>

<mosaic_0001>
module attributes {stable_mosaic.version = 11 : i64} {
  func.func @_fused_kernel(%arg0: i32, %arg1: memref<8x3xi32, #tpu.memory_space<vmem>>, %arg2: memref<8x5xf32, #tpu.memory_space<vmem>>, %arg3: memref<16x32xf32, #tpu.memory_space<vmem>>, %arg4: memref<8x32xf32, #tpu.memory_space<vmem>>, %arg5: memref<8x32xf32, #tpu.memory_space<vmem>>, %arg6: memref<8x32xf32, #tpu.memory_space<vmem>>, %arg7: memref<1x32xf32, #tpu.memory_space<vmem>>, %arg8: memref<32x16xf32, #tpu.memory_space<vmem>>, %arg9: memref<1x16xf32, #tpu.memory_space<vmem>>, %arg10: memref<16x2xf32, #tpu.memory_space<vmem>>, %arg11: memref<1x2xf32, #tpu.memory_space<vmem>>, %arg12: memref<8x2xf32, #tpu.memory_space<vmem>>) attributes {dimension_semantics = [#tpu.dimension_semantics<parallel>], iteration_bounds = array<i64: 1>, scalar_prefetch = 0 : i64, scratch_operands = 0 : i64, tpu.core_type = #tpu.core_type<tc>, window_params = [{transform_indices = @transform_0, window_bounds = array<i64: 8, 3>}, {transform_indices = @transform_1, window_bounds = array<i64: 8, 5>}, {pipeline_mode = #tpu.pipeline_mode<synchronous>, transform_indices = @transform_2, window_bounds = array<i64: 16, 32>}, {pipeline_mode = #tpu.pipeline_mode<synchronous>, transform_indices = @transform_3, window_bounds = array<i64: 8, 32>}, {pipeline_mode = #tpu.pipeline_mode<synchronous>, transform_indices = @transform_4, window_bounds = array<i64: 8, 32>}, {pipeline_mode = #tpu.pipeline_mode<synchronous>, transform_indices = @transform_5, window_bounds = array<i64: 8, 32>}, {pipeline_mode = #tpu.pipeline_mode<synchronous>, transform_indices = @transform_6, window_bounds = array<i64: 1, 32>}, {pipeline_mode = #tpu.pipeline_mode<synchronous>, transform_indices = @transform_7, window_bounds = array<i64: 32, 16>}, {pipeline_mode = #tpu.pipeline_mode<synchronous>, transform_indices = @transform_8, window_bounds = array<i64: 1, 16>}, {pipeline_mode = #tpu.pipeline_mode<synchronous>, transform_indices = @transform_9, window_bounds = array<i64: 16, 2>}, {pipeline_mode = #tpu.pipeline_mode<synchronous>, transform_indices = @transform_10, window_bounds = array<i64: 1, 2>}, {transform_indices = @transform_11, window_bounds = array<i64: 8, 2>}]} {
    %c0 = arith.constant 0 : index
    %c0_0 = arith.constant 0 : index
    %0 = vector.load %arg2[%c0, %c0_0] : memref<8x5xf32, #tpu.memory_space<vmem>>, vector<8x5xf32>
    %cst = arith.constant 0.000000e+00 : f32
    %1 = vector.broadcast %cst : f32 to vector<8x3xf32>
    %2 = tpu.concatenate %0, %1 in 1 : vector<8x5xf32>, vector<8x3xf32> -> vector<8x8xf32>
    %c0_1 = arith.constant 0 : index
    %c0_2 = arith.constant 0 : index
    %3 = vector.load %arg6[%c0_1, %c0_2] : memref<8x32xf32, #tpu.memory_space<vmem>>, vector<8x32xf32>
    %cst_3 = arith.constant dense<0.000000e+00> : vector<8x32xf32>
    %4 = tpu.matmul %2, %3, %cst_3 {dimension_numbers = #tpu.dot_dimension_numbers<[1], [0], [0], [1], [0, 0, 1, 1], [], []>} : vector<8x8xf32>, vector<8x32xf32>, vector<8x32xf32> -> vector<8x32xf32>
    %c0_4 = arith.constant 0 : index
    %c0_5 = arith.constant 0 : index
    %5 = vector.load %arg7[%c0_4, %c0_5] : memref<1x32xf32, #tpu.memory_space<vmem>>, vector<1x32xf32>
    %6 = vector.broadcast %5 : vector<1x32xf32> to vector<8x32xf32>
    %7 = arith.addf %4, %6 : vector<8x32xf32>
    %c0_6 = arith.constant 0 : index
    %c0_7 = arith.constant 0 : index
    %8 = vector.load %arg3[%c0_6, %c0_7] : memref<16x32xf32, #tpu.memory_space<vmem>>, vector<16x32xf32>
    %c0_8 = arith.constant 0 : index
    %c0_9 = arith.constant 0 : index
    %9 = vector.load %arg1[%c0_8, %c0_9] : memref<8x3xi32, #tpu.memory_space<vmem>>, vector<8x1xi32>
    %10 = tpu.iota {dimensions = array<i32: 1>} : vector<8x16xi32>
    %11 = vector.broadcast %9 : vector<8x1xi32> to vector<8x16xi32>
    %12 = arith.cmpi eq, %11, %10 : vector<8x16xi32>
    %13 = arith.extui %12 : vector<8x16xi1> to vector<8x16xi32>
    %14 = arith.sitofp %13 : vector<8x16xi32> to vector<8x16xf32>
    %cst_10 = arith.constant dense<0.000000e+00> : vector<8x32xf32>
    %15 = tpu.matmul %14, %8, %cst_10 {dimension_numbers = #tpu.dot_dimension_numbers<[1], [0], [0], [1], [0, 0, 1, 1], [], []>} : vector<8x16xf32>, vector<16x32xf32>, vector<8x32xf32> -> vector<8x32xf32>
    %16 = arith.addf %7, %15 : vector<8x32xf32>
    %c0_11 = arith.constant 0 : index
    %c0_12 = arith.constant 0 : index
    %17 = vector.load %arg4[%c0_11, %c0_12] : memref<8x32xf32, #tpu.memory_space<vmem>>, vector<8x32xf32>
    %c0_13 = arith.constant 0 : index
    %c1 = arith.constant 1 : index
    %18 = vector.load %arg1[%c0_13, %c1] : memref<8x3xi32, #tpu.memory_space<vmem>>, vector<8x1xi32>
    %19 = tpu.iota {dimensions = array<i32: 1>} : vector<8x8xi32>
    %20 = vector.broadcast %18 : vector<8x1xi32> to vector<8x8xi32>
    %21 = arith.cmpi eq, %20, %19 : vector<8x8xi32>
    %22 = arith.extui %21 : vector<8x8xi1> to vector<8x8xi32>
    %23 = arith.sitofp %22 : vector<8x8xi32> to vector<8x8xf32>
    %cst_14 = arith.constant dense<0.000000e+00> : vector<8x32xf32>
    %24 = tpu.matmul %23, %17, %cst_14 {dimension_numbers = #tpu.dot_dimension_numbers<[1], [0], [0], [1], [0, 0, 1, 1], [], []>} : vector<8x8xf32>, vector<8x32xf32>, vector<8x32xf32> -> vector<8x32xf32>
    %25 = arith.addf %16, %24 : vector<8x32xf32>
    %c0_15 = arith.constant 0 : index
    %c0_16 = arith.constant 0 : index
    %26 = vector.load %arg5[%c0_15, %c0_16] : memref<8x32xf32, #tpu.memory_space<vmem>>, vector<8x32xf32>
    %c0_17 = arith.constant 0 : index
    %c2 = arith.constant 2 : index
    %27 = vector.load %arg1[%c0_17, %c2] : memref<8x3xi32, #tpu.memory_space<vmem>>, vector<8x1xi32>
    %28 = tpu.iota {dimensions = array<i32: 1>} : vector<8x8xi32>
    %29 = vector.broadcast %27 : vector<8x1xi32> to vector<8x8xi32>
    %30 = arith.cmpi eq, %29, %28 : vector<8x8xi32>
    %31 = arith.extui %30 : vector<8x8xi1> to vector<8x8xi32>
    %32 = arith.sitofp %31 : vector<8x8xi32> to vector<8x8xf32>
    %cst_18 = arith.constant dense<0.000000e+00> : vector<8x32xf32>
    %33 = tpu.matmul %32, %26, %cst_18 {dimension_numbers = #tpu.dot_dimension_numbers<[1], [0], [0], [1], [0, 0, 1, 1], [], []>} : vector<8x8xf32>, vector<8x32xf32>, vector<8x32xf32> -> vector<8x32xf32>
    %34 = arith.addf %25, %33 : vector<8x32xf32>
    %cst_19 = arith.constant 0.000000e+00 : f32
    %35 = vector.broadcast %cst_19 : f32 to vector<8x32xf32>
    %36 = arith.maximumf %34, %35 : vector<8x32xf32>
    %c0_20 = arith.constant 0 : index
    %c0_21 = arith.constant 0 : index
    %37 = vector.load %arg8[%c0_20, %c0_21] : memref<32x16xf32, #tpu.memory_space<vmem>>, vector<32x16xf32>
    %c0_22 = arith.constant 0 : index
    %c0_23 = arith.constant 0 : index
    %38 = vector.load %arg9[%c0_22, %c0_23] : memref<1x16xf32, #tpu.memory_space<vmem>>, vector<1x16xf32>
    %cst_24 = arith.constant dense<0.000000e+00> : vector<8x16xf32>
    %39 = tpu.matmul %36, %37, %cst_24 {dimension_numbers = #tpu.dot_dimension_numbers<[1], [0], [0], [1], [0, 0, 1, 1], [], []>} : vector<8x32xf32>, vector<32x16xf32>, vector<8x16xf32> -> vector<8x16xf32>
    %40 = vector.broadcast %38 : vector<1x16xf32> to vector<8x16xf32>
    %41 = arith.addf %39, %40 : vector<8x16xf32>
    %cst_25 = arith.constant 0.000000e+00 : f32
    %42 = vector.broadcast %cst_25 : f32 to vector<8x16xf32>
    %43 = arith.maximumf %41, %42 : vector<8x16xf32>
    %c0_26 = arith.constant 0 : index
    %c0_27 = arith.constant 0 : index
    %44 = vector.load %arg10[%c0_26, %c0_27] : memref<16x2xf32, #tpu.memory_space<vmem>>, vector<16x2xf32>
    %c0_28 = arith.constant 0 : index
    %c0_29 = arith.constant 0 : index
    %45 = vector.load %arg11[%c0_28, %c0_29] : memref<1x2xf32, #tpu.memory_space<vmem>>, vector<1x2xf32>
    %cst_30 = arith.constant dense<0.000000e+00> : vector<8x2xf32>
    %46 = tpu.matmul %43, %44, %cst_30 {dimension_numbers = #tpu.dot_dimension_numbers<[1], [0], [0], [1], [0, 0, 1, 1], [], []>} : vector<8x16xf32>, vector<16x2xf32>, vector<8x2xf32> -> vector<8x2xf32>
    %47 = vector.broadcast %45 : vector<1x2xf32> to vector<8x2xf32>
    %48 = arith.addf %46, %47 : vector<8x2xf32>
    %c0_31 = arith.constant 0 : index
    %c0_32 = arith.constant 0 : index
    %49 = vector.load %arg12[%c0_31, %c0_32] : memref<8x2xf32, #tpu.memory_space<vmem>>, vector<8x2xf32>
    tpu.vector_store %arg12[%c0_31, %c0_32], %48 {strides = array<i32>} : memref<8x2xf32, #tpu.memory_space<vmem>>, vector<8x2xf32>,
    return
  }
  func.func @transform_0(%arg0: i32) -> (i32, i32) {
    %c0_i32 = arith.constant 0 : i32
    %c0_i32_0 = arith.constant 0 : i32
    return %arg0, %c0_i32 : i32, i32
  }
  func.func @transform_1(%arg0: i32) -> (i32, i32) {
    %c0_i32 = arith.constant 0 : i32
    %c0_i32_0 = arith.constant 0 : i32
    return %arg0, %c0_i32 : i32, i32
  }
  func.func @transform_2(%arg0: i32) -> (i32, i32) {
    %c0_i32 = arith.constant 0 : i32
    %c0_i32_0 = arith.constant 0 : i32
    %c0_i32_1 = arith.constant 0 : i32
    return %c0_i32, %c0_i32_0 : i32, i32
  }
  func.func @transform_3(%arg0: i32) -> (i32, i32) {
    %c0_i32 = arith.constant 0 : i32
    %c0_i32_0 = arith.constant 0 : i32
    %c0_i32_1 = arith.constant 0 : i32
    return %c0_i32, %c0_i32_0 : i32, i32
  }
  func.func @transform_4(%arg0: i32) -> (i32, i32) {
    %c0_i32 = arith.constant 0 : i32
    %c0_i32_0 = arith.constant 0 : i32
    %c0_i32_1 = arith.constant 0 : i32
    return %c0_i32, %c0_i32_0 : i32, i32
  }
  func.func @transform_5(%arg0: i32) -> (i32, i32) {
    %c0_i32 = arith.constant 0 : i32
    %c0_i32_0 = arith.constant 0 : i32
    %c0_i32_1 = arith.constant 0 : i32
    return %c0_i32, %c0_i32_0 : i32, i32
  }
  func.func @transform_6(%arg0: i32) -> (i32, i32) {
    %c0_i32 = arith.constant 0 : i32
    %c0_i32_0 = arith.constant 0 : i32
    %c0_i32_1 = arith.constant 0 : i32
    return %c0_i32, %c0_i32_0 : i32, i32
  }
  func.func @transform_7(%arg0: i32) -> (i32, i32) {
    %c0_i32 = arith.constant 0 : i32
    %c0_i32_0 = arith.constant 0 : i32
    %c0_i32_1 = arith.constant 0 : i32
    return %c0_i32, %c0_i32_0 : i32, i32
  }
  func.func @transform_8(%arg0: i32) -> (i32, i32) {
    %c0_i32 = arith.constant 0 : i32
    %c0_i32_0 = arith.constant 0 : i32
    %c0_i32_1 = arith.constant 0 : i32
    return %c0_i32, %c0_i32_0 : i32, i32
  }
  func.func @transform_9(%arg0: i32) -> (i32, i32) {
    %c0_i32 = arith.constant 0 : i32
    %c0_i32_0 = arith.constant 0 : i32
    %c0_i32_1 = arith.constant 0 : i32
    return %c0_i32, %c0_i32_0 : i32, i32
  }
  func.func @transform_10(%arg0: i32) -> (i32, i32) {
    %c0_i32 = arith.constant 0 : i32
    %c0_i32_0 = arith.constant 0 : i32
    %c0_i32_1 = arith.constant 0 : i32
    return %c0_i32, %c0_i32_0 : i32, i32
  }
  func.func @transform_11(%arg0: i32) -> (i32, i32) {
    %c0_i32 = arith.constant 0 : i32
    %c0_i32_0 = arith.constant 0 : i32
    return %arg0, %c0_i32 : i32, i32
  }
}

</mosaic_0001>

<llo_original>
// kernel: fused_tabular_pallas.1
$region0: #{fused_tabular_pallas.1}
  #allocation0 [shape = 'u32[]', space=smem, size = 0x4, offset = 0x4, fixed_abs, tag = 'smem constant byte address 0x4 - core index']
  #allocation1 [shape = 'u32[72,128]{1,0:T(1,128)}', space=vmem, size = 0x9000, scoped, tag = 'internal scratch']
  %s0 = inlined_call_operand.vmem [shape: s32[8,3], index: 0, kind: input, shape index: {}]
  %s1 = inlined_call_operand.vmem [shape: f32[8,5], index: 1, kind: input, shape index: {}]
  %s2 = inlined_call_operand.vmem [shape: f32[16,32], index: 2, kind: input, shape index: {}]
  %s3 = inlined_call_operand.vmem [shape: f32[8,32], index: 3, kind: input, shape index: {}]
  %s4 = inlined_call_operand.vmem [shape: f32[8,32], index: 4, kind: input, shape index: {}]
  %s5 = inlined_call_operand.vmem [shape: f32[8,32], index: 5, kind: input, shape index: {}]
  %s6 = inlined_call_operand.vmem [shape: f32[1,32], index: 6, kind: input, shape index: {}]
  %s7 = inlined_call_operand.vmem [shape: f32[32,16], index: 7, kind: input, shape index: {}]
  %s8 = inlined_call_operand.vmem [shape: f32[1,16], index: 8, kind: input, shape index: {}]
  %s9 = inlined_call_operand.vmem [shape: f32[16,2], index: 9, kind: input, shape index: {}]
  %s10 = inlined_call_operand.vmem [shape: f32[1,2], index: 10, kind: input, shape index: {}]
  %s11 = inlined_call_operand.vmem [shape: f32[8,2], index: 11, kind: output, shape index: {}]
  %s12 = sld [smem:[#allocation0]]
  $region54: #{fused_tabular_pallas.1} parent=0
    _
  %s14 = ssub.s32 1, %s12
  %s15 = scalar_select 0, %s14, %s12
  // Predicated region
  $region2: #{fused_tabular_pallas.1} parent=0 // pred_check
    _
  $region3: #{fused_tabular_pallas.1} parent=0 // pred_check_branch
    %17 = sbr.rel (0) target = $region5
  $region4: #{fused_tabular_pallas.1} parent=0 // pred_region
    _
  $region5: #{fused_tabular_pallas.1} parent=0 // pred_fallthru
    _
  // Predicated region
  $region6: #{fused_tabular_pallas.1} parent=0 // pred_check
    _
  $region7: #{fused_tabular_pallas.1} parent=0 // pred_check_branch
    %19 = sbr.rel (0) target = $region9
  $region8: #{fused_tabular_pallas.1} parent=0 // pred_region
    _
  $region9: #{fused_tabular_pallas.1} parent=0 // pred_fallthru
    _
  // Predicated region
  $region10: #{fused_tabular_pallas.1} parent=0 // pred_check
    _
  $region11: #{fused_tabular_pallas.1} parent=0 // pred_check_branch
    %21 = sbr.rel (0) target = $region13
  $region12: #{fused_tabular_pallas.1} parent=0 // pred_region
    _
  $region13: #{fused_tabular_pallas.1} parent=0 // pred_fallthru
    _
  // Predicated region
  $region14: #{fused_tabular_pallas.1} parent=0 // pred_check
    _
  $region15: #{fused_tabular_pallas.1} parent=0 // pred_check_branch
    %23 = sbr.rel (0) target = $region17
  $region16: #{fused_tabular_pallas.1} parent=0 // pred_region
    _
  $region17: #{fused_tabular_pallas.1} parent=0 // pred_fallthru
    _
  // Predicated region
  $region18: #{fused_tabular_pallas.1} parent=0 // pred_check
    _
  $region19: #{fused_tabular_pallas.1} parent=0 // pred_check_branch
    %25 = sbr.rel (0) target = $region21
  $region20: #{fused_tabular_pallas.1} parent=0 // pred_region
    _
  $region21: #{fused_tabular_pallas.1} parent=0 // pred_fallthru
    _
  // Predicated region
  $region22: #{fused_tabular_pallas.1} parent=0 // pred_check
    _
  $region23: #{fused_tabular_pallas.1} parent=0 // pred_check_branch
    %27 = sbr.rel (0) target = $region25
  $region24: #{fused_tabular_pallas.1} parent=0 // pred_region
    _
  $region25: #{fused_tabular_pallas.1} parent=0 // pred_fallthru
    _
  // Predicated region
  $region26: #{fused_tabular_pallas.1} parent=0 // pred_check
    _
  $region27: #{fused_tabular_pallas.1} parent=0 // pred_check_branch
    %29 = sbr.rel (0) target = $region29
  $region28: #{fused_tabular_pallas.1} parent=0 // pred_region
    _
  $region29: #{fused_tabular_pallas.1} parent=0 // pred_fallthru
    _
  // Predicated region
  $region30: #{fused_tabular_pallas.1} parent=0 // pred_check
    _
  $region31: #{fused_tabular_pallas.1} parent=0 // pred_check_branch
    %31 = sbr.rel (0) target = $region33
  $region32: #{fused_tabular_pallas.1} parent=0 // pred_region
    _
  $region33: #{fused_tabular_pallas.1} parent=0 // pred_fallthru
    _
  // Predicated region
  $region34: #{fused_tabular_pallas.1} parent=0 // pred_check
    _
  $region35: #{fused_tabular_pallas.1} parent=0 // pred_check_branch
    %33 = sbr.rel (0) target = $region37
  $region36: #{fused_tabular_pallas.1} parent=0 // pred_region
    _
  $region37: #{fused_tabular_pallas.1} parent=0 // pred_fallthru
    _
  // Predicated region
  $region38: #{fused_tabular_pallas.1} parent=0 // pred_check
    _
  $region39: #{fused_tabular_pallas.1} parent=0 // pred_check_branch
    %35 = sbr.rel (0) target = $region41
  $region40: #{fused_tabular_pallas.1} parent=0 // pred_region
    _
  $region41: #{fused_tabular_pallas.1} parent=0 // pred_fallthru
    _
  // Predicated region
  $region42: #{fused_tabular_pallas.1} parent=0 // pred_check
    _
  $region43: #{fused_tabular_pallas.1} parent=0 // pred_check_branch
    %37 = sbr.rel (0) target = $region45
  $region44: #{fused_tabular_pallas.1} parent=0 // pred_region
    _
  $region45: #{fused_tabular_pallas.1} parent=0 // pred_fallthru
    _
  %v38 = vld [vmem:[%s1] sm:$0xff]
  %vm39 = vcmask 39936
  %v40 = vsel %vm39, %v38, 0.0
  %v41 = vld [vmem:[%s5] sm:$0xff]
  %v42 = vld [vmem:[%s6] sm:$0x1]
  %v44 = vperm.slane %v42, 0
  %vm46 = vcmask 64512
  %v48 = vsel %vm46, %v40, 0
  %50 = vmatpush.msra.mxu0 0.0
  %51 = vmatpush.msra.mxu0 0.0
  %52 = vmatpush.msra.mxu0 0.0
  %53 = vmatpush.msra.mxu0 0.0
  %54 = vmatpush.msra.mxu0 0.0
  %55 = vmatpush.msra.mxu0 0.0
  %56 = vmatpush.msra.mxu0 0.0
  %57 = vmatpush.msra.mxu0 0.0
  %58 = vmatpush.msra.mxu0 0.0
  %59 = vmatpush.msra.mxu0 0.0
  %60 = vmatpush.msra.mxu0 0.0
  %61 = vmatpush.msra.mxu0 0.0
  %62 = vmatpush.msra.mxu0 0.0
  %63 = vmatpush.msra.mxu0 0.0
  %64 = vmatpush.msra.mxu0 0.0
  %65 = vmatpush.msra.mxu0 %v41
  %66 = vmatmul.f32.gmra.mxu0 %v48
  %v67 = vpop.f32.mrf.mxu0
  %v68 = vadd.f32 %v44, %v67
  %69 = vdwg.mxu0
  %v70 = vld [vmem:[%s2] sm:$0xff]
  %v71 = vld [vmem:[%s2 + $0x8] sm:$0xff]
  %v72 = vld [vmem:[%s0] sm:$0xff]
  %v73 = vlaneseq
  %v74 = vand.u32 %v73, 127
  %75 = vset.pattern.permute.xlu0 0
  %76 = vperm.xlu0 %75, %v72
  %v77 = vpop.permute.xlu0 %76
  %vm78 = vcmp.eq.s32.totalorder %v77, %v74
  %v79 = vsel %vm78, 1, 0
  %v80 = vcvt.s32.f32 %v79
  %vm81 = vcmask 130048
  %v83 = vsel %vm81, %v80, 0
  %85 = vmatpush.msra.mxu0 0.0
  %86 = vmatpush.msra.mxu0 0.0
  %87 = vmatpush.msra.mxu0 0.0
  %88 = vmatpush.msra.mxu0 0.0
  %89 = vmatpush.msra.mxu0 0.0
  %90 = vmatpush.msra.mxu0 0.0
  %91 = vmatpush.msra.mxu0 0.0
  %92 = vmatpush.msra.mxu0 0.0
  %93 = vmatpush.msra.mxu0 0.0
  %94 = vmatpush.msra.mxu0 0.0
  %95 = vmatpush.msra.mxu0 0.0
  %96 = vmatpush.msra.mxu0 0.0
  %97 = vmatpush.msra.mxu0 0.0
  %98 = vmatpush.msra.mxu0 0.0
  %99 = vmatpush.msra.mxu0 %v71
  %100 = vmatpush.msra.mxu0 %v70
  %101 = vmatmul.f32.gmra.mxu0 %v83
  %v102 = vpop.f32.mrf.mxu0
  %v103 = vadd.f32 0.0, %v102
  %104 = vdwg.mxu0
  %v105 = vadd.f32 %v68, %v103
  %v106 = vld [vmem:[%s3] sm:$0xff]
  %107 = vset.pattern.permute.xlu0 1
  %108 = vperm.xlu0 %107, %v72
  %v109 = vpop.permute.xlu0 %108
  %vm110 = vcmp.eq.s32.totalorder %v109, %v74
  %v111 = vsel %vm110, 1, 0
  %v112 = vcvt.s32.f32 %v111
  %v114 = vsel %vm46, %v112, 0
  %116 = vmatpush.msra.mxu0 0.0
  %117 = vmatpush.msra.mxu0 0.0
  %118 = vmatpush.msra.mxu0 0.0
  %119 = vmatpush.msra.mxu0 0.0
  %120 = vmatpush.msra.mxu0 0.0
  %121 = vmatpush.msra.mxu0 0.0
  %122 = vmatpush.msra.mxu0 0.0
  %123 = vmatpush.msra.mxu0 0.0
  %124 = vmatpush.msra.mxu0 0.0
  %125 = vmatpush.msra.mxu0 0.0
  %126 = vmatpush.msra.mxu0 0.0
  %127 = vmatpush.msra.mxu0 0.0
  %128 = vmatpush.msra.mxu0 0.0
  %129 = vmatpush.msra.mxu0 0.0
  %130 = vmatpush.msra.mxu0 0.0
  %131 = vmatpush.msra.mxu0 %v106
  %132 = vmatmul.f32.gmra.mxu0 %v114
  %v133 = vpop.f32.mrf.mxu0
  %v134 = vadd.f32 0.0, %v133
  %135 = vdwg.mxu0
  %v136 = vadd.f32 %v105, %v134
  %v137 = vld [vmem:[%s4] sm:$0xff]
  %138 = vset.pattern.permute.xlu0 2
  %139 = vperm.xlu0 %138, %v72
  %v140 = vpop.permute.xlu0 %139
  %vm141 = vcmp.eq.s32.totalorder %v140, %v74
  %v142 = vsel %vm141, 1, 0
  %v143 = vcvt.s32.f32 %v142
  %v145 = vsel %vm46, %v143, 0
  %147 = vmatpush.msra.mxu0 0.0
  %148 = vmatpush.msra.mxu0 0.0
  %149 = vmatpush.msra.mxu0 0.0
  %150 = vmatpush.msra.mxu0 0.0
  %151 = vmatpush.msra.mxu0 0.0
  %152 = vmatpush.msra.mxu0 0.0
  %153 = vmatpush.msra.mxu0 0.0
  %154 = vmatpush.msra.mxu0 0.0
  %155 = vmatpush.msra.mxu0 0.0
  %156 = vmatpush.msra.mxu0 0.0
  %157 = vmatpush.msra.mxu0 0.0
  %158 = vmatpush.msra.mxu0 0.0
  %159 = vmatpush.msra.mxu0 0.0
  %160 = vmatpush.msra.mxu0 0.0
  %161 = vmatpush.msra.mxu0 0.0
  %162 = vmatpush.msra.mxu0 %v137
  %163 = vmatmul.f32.gmra.mxu0 %v145
  %v164 = vpop.f32.mrf.mxu0
  %v165 = vadd.f32 0.0, %v164
  %166 = vdwg.mxu0
  %v167 = vadd.f32 %v136, %v165
  %v168 = vmax.f32 %v167, 0.0
  %v169 = vld [vmem:[%s7] sm:$0xff]
  %v170 = vld [vmem:[%s7 + $0x8] sm:$0xff]
  %v171 = vld [vmem:[%s7 + $0x10] sm:$0xff]
  %v172 = vld [vmem:[%s7 + $0x18] sm:$0xff]
  %v173 = vld [vmem:[%s8] sm:$0x1]
  %v175 = vperm.slane %v173, 0
  %vm177 = vcmask 261120
  %v179 = vsel %vm177, %v168, 0
  %181 = vmatpush.msra.mxu0 0.0
  %182 = vmatpush.msra.mxu0 0.0
  %183 = vmatpush.msra.mxu0 0.0
  %184 = vmatpush.msra.mxu0 0.0
  %185 = vmatpush.msra.mxu0 0.0
  %186 = vmatpush.msra.mxu0 0.0
  %187 = vmatpush.msra.mxu0 0.0
  %188 = vmatpush.msra.mxu0 0.0
  %189 = vmatpush.msra.mxu0 0.0
  %190 = vmatpush.msra.mxu0 0.0
  %191 = vmatpush.msra.mxu0 0.0
  %192 = vmatpush.msra.mxu0 0.0
  %193 = vmatpush.msra.mxu0 %v172
  %194 = vmatpush.msra.mxu0 %v171
  %195 = vmatpush.msra.mxu0 %v170
  %196 = vmatpush.msra.mxu0 %v169
  %197 = vmatmul.f32.gmra.mxu0 %v179
  %v198 = vpop.f32.mrf.mxu0
  %v199 = vadd.f32 %v175, %v198
  %200 = vdwg.mxu0
  %v201 = vmax.f32 %v199, 0.0
  %v202 = vld [vmem:[%s9] sm:$0xff]
  %v203 = vld [vmem:[%s9 + $0x8] sm:$0xff]
  %v204 = vld [vmem:[%s10] sm:$0x1]
  %v206 = vperm.slane %v204, 0
  %v209 = vsel %vm81, %v201, 0
  %211 = vmatpush.msra.mxu0 0.0
  %212 = vmatpush.msra.mxu0 0.0
  %213 = vmatpush.msra.mxu0 0.0
  %214 = vmatpush.msra.mxu0 0.0
  %215 = vmatpush.msra.mxu0 0.0
  %216 = vmatpush.msra.mxu0 0.0
  %217 = vmatpush.msra.mxu0 0.0
  %218 = vmatpush.msra.mxu0 0.0
  %219 = vmatpush.msra.mxu0 0.0
  %220 = vmatpush.msra.mxu0 0.0
  %221 = vmatpush.msra.mxu0 0.0
  %222 = vmatpush.msra.mxu0 0.0
  %223 = vmatpush.msra.mxu0 0.0
  %224 = vmatpush.msra.mxu0 0.0
  %225 = vmatpush.msra.mxu0 %v203
  %226 = vmatpush.msra.mxu0 %v202
  %227 = vmatmul.f32.gmra.mxu0 %v209
  %v228 = vpop.f32.mrf.mxu0
  %v229 = vadd.f32 %v206, %v228
  %230 = vdwg.mxu0
  %vm231 = vcmask 15360
  %232 = vst.msk [vmem:[%s11] sm:$0xff] %vm231, %v229
  // Predicated region
  $region46: #{fused_tabular_pallas.1} parent=0 // pred_check
    _
  $region47: #{fused_tabular_pallas.1} parent=0 // pred_check_branch
    %234 = sbr.rel (0) target = $region49
  $region48: #{fused_tabular_pallas.1} parent=0 // pred_region
    _
  $region49: #{fused_tabular_pallas.1} parent=0 // pred_fallthru
    _
  // Predicated region
  $region50: #{fused_tabular_pallas.1} parent=0 // pred_check
    _
  $region51: #{fused_tabular_pallas.1} parent=0 // pred_check_branch
    %236 = sbr.rel (0) target = $region53
  $region52: #{fused_tabular_pallas.1} parent=0 // pred_region
    _
  $region53: #{fused_tabular_pallas.1} parent=0 // pred_fallthru
    _

</llo_original>
